<compile_context>
chip_gen: v5e
topology: v5e:2x2
jax: 0.10.0
libtpu: 0.0.40
codegen_flags: <defaults>
</compile_context>

<pallas_src>
import functools

import jax
import jax.numpy as jnp
from jax.experimental import pallas as pl
from jax.experimental.pallas import tpu as pltpu

LANE = 128     # TPU lane width
HIDDEN = 10    # PolicyNLP hidden width (pre-padding)


def _round_up(x, mult):
    return ((x + mult - 1) // mult) * mult


def _policy_mlp_kernel(x_ref, w1_ref, b1_ref, w2_ref, b2_ref, w3_ref, b3_ref, o_ref):
    m = o_ref.shape[-1]                       # real output width (<= 128)
    x = x_ref[...]                            # (TB, n) f32
    # Layer 1: (TB, n) @ (n, 128) + b1, ReLU  -- f32 MXU, f32 accumulate.
    h1 = jnp.dot(x, w1_ref[...], preferred_element_type=jnp.float32)
    h1 = jnp.maximum(h1 + b1_ref[...], 0.0)
    # Layer 2: (TB, 128) @ (128, 128) + b2, ReLU.
    h2 = jnp.dot(h1, w2_ref[...], preferred_element_type=jnp.float32)
    h2 = jnp.maximum(h2 + b2_ref[...], 0.0)
    # Layer 3: (TB, 128) @ (128, 128) + b3; only the first m lanes are real.
    out = jnp.dot(h2, w3_ref[...], preferred_element_type=jnp.float32)
    out = out + b3_ref[...]
    o_ref[...] = out[:, :m].astype(o_ref.dtype)   # store only the m real lanes to HBM


def init_policy_nlp_params(key, n, m, hidden=HIDDEN):
    """Deterministic init mimicking nn.Linear's U(-1/sqrt(fan_in), 1/sqrt(fan_in)).

    Weights stored (in, out) so y = x @ W + b matches PyTorch's x @ W_pt.T + b.
    """
    def linear(key, fan_in, fan_out):
        kw, kb = jax.random.split(key)
        bound = 1.0 / jnp.sqrt(fan_in)
        w = jax.random.uniform(kw, (fan_in, fan_out), jnp.float32, -bound, bound)
        b = jax.random.uniform(kb, (1, fan_out), jnp.float32, -bound, bound)
        return w, b

    k1, k2, k3 = jax.random.split(key, 3)
    w1, b1 = linear(k1, n, hidden)
    w2, b2 = linear(k2, hidden, hidden)
    w3, b3 = linear(k3, hidden, m)
    return (w1, b1, w2, b2, w3, b3)


def prepare_params(params):
    """One-time prep: zero-pad hidden / output widths to 128 lanes (f32 kept).

    Padding is mathematically inert (padded weight rows/cols and biases are zero, and
    ReLU(0) = 0), so the first m output lanes equal the unpadded result exactly.
    Returns (padded_params, m).
    """
    w1, b1, w2, b2, w3, b3 = params
    n, hidden = w1.shape
    m = w3.shape[1]
    hp = _round_up(hidden, LANE)
    mp = _round_up(m, LANE)

    def pad_to(a, rows, cols):
        return jnp.pad(a, ((0, rows - a.shape[0]), (0, cols - a.shape[1]))).astype(jnp.float32)

    padded = (
        pad_to(w1, n, hp),  pad_to(b1, 1, hp),
        pad_to(w2, hp, hp), pad_to(b2, 1, hp),
        pad_to(w3, hp, mp), pad_to(b3, 1, mp),
    )
    return padded, m


@functools.partial(jax.jit, static_argnames=("m", "tile_rows"))
def policy_nlp_forward(x, padded_params, *, m, tile_rows=None):
    """Fused forward pass of PolicyNLP. x: (B, n) float32 -> (B, m) float32."""
    w1, b1, w2, b2, w3, b3 = padded_params
    B, n = x.shape
    hp = w2.shape[0]

    # Batch tile: big enough to amortize per-grid-step overhead, small enough that the
    # double-buffered streamed tiles (x in, out back) stay well under scoped VMEM.
    if tile_rows is None:
        budget = 8 << 20                              # ~8 MiB for streamed tiles
        bytes_per_row = 2 * 4 * (n + m)               # f32 in+out, double-buffered
        tile_rows = max(8, min(8192, budget // max(bytes_per_row, 1)))
    TB = min(_round_up(tile_rows, 8), _round_up(B, 8))
    grid_b = pl.cdiv(B, TB)
    B_pad = grid_b * TB

    if B_pad != B:
        x = jnp.pad(x, ((0, B_pad - B), (0, 0)))

    cost = pl.CostEstimate(
        flops=2 * B_pad * (n * hp + hp * hp + hp * hp),
        transcendentals=0,
        bytes_accessed=int(B_pad * n * 4 + B_pad * m * 4
                           + sum(int(p.size) * 4 for p in padded_params)),
    )

    # Weights/biases: full blocks, index_map ignores the batch grid index -> loaded
    # once and VMEM-resident across all grid steps.
    const2 = lambda a: pl.BlockSpec(a.shape, lambda i: (0, 0))

    out = pl.pallas_call(
        _policy_mlp_kernel,
        out_shape=jax.ShapeDtypeStruct((B_pad, m), jnp.float32),
        grid=(grid_b,),
        in_specs=[
            pl.BlockSpec((TB, n), lambda i: (i, 0)),   # stream x tiles
            const2(w1), const2(b1),
            const2(w2), const2(b2),
            const2(w3), const2(b3),
        ],
        out_specs=pl.BlockSpec((TB, m), lambda i: (i, 0)),   # un-padded writeback
        compiler_params=pltpu.CompilerParams(
            dimension_semantics=("parallel",),                # megacore-shardable batch
        ),
        cost_estimate=cost,
    )(x, w1, b1, w2, b2, w3, b3)

    return out[:B] if B_pad != B else out


def policy_nlp_reference(x, params):
    """Pure-JAX f32 reference (mirrors PyTorch nn.Sequential forward)."""
    w1, b1, w2, b2, w3, b3 = params
    h1 = jnp.maximum(x @ w1 + b1, 0.0)
    h2 = jnp.maximum(h1 @ w2 + b2, 0.0)
    return h2 @ w3 + b3


if __name__ == "__main__":
    key = jax.random.PRNGKey(0)
    k_params, k_x1, k_x2 = jax.random.split(key, 3)

    n, m = 32, 4   # input dim, output dim
    params = init_policy_nlp_params(k_params, n, m)
    padded_params, m_out = prepare_params(params)

    # Case 1: tiny batch (single tile).
    x1 = jax.random.normal(k_x1, (8, n), dtype=jnp.float32)
    out1 = jax.block_until_ready(policy_nlp_forward(x1, padded_params, m=m_out))
    ref1 = policy_nlp_reference(x1, params)
    assert out1.shape == (8, m), out1.shape
    assert jnp.allclose(out1, ref1, atol=1e-2, rtol=1e-2), "mismatch (case 1)"

    # Case 2: batch not a multiple of the tile -> multi-tile grid + row-padding path.
    x2 = jax.random.normal(k_x2, (40, n), dtype=jnp.float32)
    out2 = jax.block_until_ready(
        policy_nlp_forward(x2, padded_params, m=m_out, tile_rows=16))
    ref2 = policy_nlp_reference(x2, params)
    assert out2.shape == (40, m), out2.shape
    assert jnp.allclose(out2, ref2, atol=1e-2, rtol=1e-2), "mismatch (case 2)"

    print("KERNEL_OK")
</pallas_src>

<mosaic_0001>
module attributes {stable_mosaic.version = 11 : i64} {
  func.func @_policy_mlp_kernel(%arg0: i32, %arg1: memref<8x32xf32, #tpu.memory_space<vmem>>, %arg2: memref<32x128xf32, #tpu.memory_space<vmem>>, %arg3: memref<1x128xf32, #tpu.memory_space<vmem>>, %arg4: memref<128x128xf32, #tpu.memory_space<vmem>>, %arg5: memref<1x128xf32, #tpu.memory_space<vmem>>, %arg6: memref<128x128xf32, #tpu.memory_space<vmem>>, %arg7: memref<1x128xf32, #tpu.memory_space<vmem>>, %arg8: memref<8x4xf32, #tpu.memory_space<vmem>>) attributes {dimension_semantics = [#tpu.dimension_semantics<parallel>], iteration_bounds = array<i64: 1>, scalar_prefetch = 0 : i64, scratch_operands = 0 : i64, tpu.core_type = #tpu.core_type<tc>, window_params = [{transform_indices = @transform_0, window_bounds = array<i64: 8, 32>}, {pipeline_mode = #tpu.pipeline_mode<synchronous>, transform_indices = @transform_1, window_bounds = array<i64: 32, 128>}, {pipeline_mode = #tpu.pipeline_mode<synchronous>, transform_indices = @transform_2, window_bounds = array<i64: 1, 128>}, {pipeline_mode = #tpu.pipeline_mode<synchronous>, transform_indices = @transform_3, window_bounds = array<i64: 128, 128>}, {pipeline_mode = #tpu.pipeline_mode<synchronous>, transform_indices = @transform_4, window_bounds = array<i64: 1, 128>}, {pipeline_mode = #tpu.pipeline_mode<synchronous>, transform_indices = @transform_5, window_bounds = array<i64: 128, 128>}, {pipeline_mode = #tpu.pipeline_mode<synchronous>, transform_indices = @transform_6, window_bounds = array<i64: 1, 128>}, {transform_indices = @transform_7, window_bounds = array<i64: 8, 4>}]} {
    %c0 = arith.constant 0 : index
    %c0_0 = arith.constant 0 : index
    %0 = vector.load %arg1[%c0, %c0_0] : memref<8x32xf32, #tpu.memory_space<vmem>>, vector<8x32xf32>
    %c0_1 = arith.constant 0 : index
    %c0_2 = arith.constant 0 : index
    %1 = vector.load %arg2[%c0_1, %c0_2] : memref<32x128xf32, #tpu.memory_space<vmem>>, vector<32x128xf32>
    %cst = arith.constant dense<0.000000e+00> : vector<8x128xf32>
    %2 = tpu.matmul %0, %1, %cst {dimension_numbers = #tpu.dot_dimension_numbers<[1], [0], [0], [1], [0, 0, 1, 1], [], []>} : vector<8x32xf32>, vector<32x128xf32>, vector<8x128xf32> -> vector<8x128xf32>
    %c0_3 = arith.constant 0 : index
    %c0_4 = arith.constant 0 : index
    %3 = vector.load %arg3[%c0_3, %c0_4] : memref<1x128xf32, #tpu.memory_space<vmem>>, vector<1x128xf32>
    %4 = vector.broadcast %3 : vector<1x128xf32> to vector<8x128xf32>
    %5 = arith.addf %2, %4 : vector<8x128xf32>
    %cst_5 = arith.constant 0.000000e+00 : f32
    %6 = vector.broadcast %cst_5 : f32 to vector<8x128xf32>
    %7 = arith.maximumf %5, %6 : vector<8x128xf32>
    %c0_6 = arith.constant 0 : index
    %c0_7 = arith.constant 0 : index
    %8 = vector.load %arg4[%c0_6, %c0_7] : memref<128x128xf32, #tpu.memory_space<vmem>>, vector<128x128xf32>
    %cst_8 = arith.constant dense<0.000000e+00> : vector<8x128xf32>
    %9 = tpu.matmul %7, %8, %cst_8 {dimension_numbers = #tpu.dot_dimension_numbers<[1], [0], [0], [1], [0, 0, 1, 1], [], []>} : vector<8x128xf32>, vector<128x128xf32>, vector<8x128xf32> -> vector<8x128xf32>
    %c0_9 = arith.constant 0 : index
    %c0_10 = arith.constant 0 : index
    %10 = vector.load %arg5[%c0_9, %c0_10] : memref<1x128xf32, #tpu.memory_space<vmem>>, vector<1x128xf32>
    %11 = vector.broadcast %10 : vector<1x128xf32> to vector<8x128xf32>
    %12 = arith.addf %9, %11 : vector<8x128xf32>
    %cst_11 = arith.constant 0.000000e+00 : f32
    %13 = vector.broadcast %cst_11 : f32 to vector<8x128xf32>
    %14 = arith.maximumf %12, %13 : vector<8x128xf32>
    %c0_12 = arith.constant 0 : index
    %c0_13 = arith.constant 0 : index
    %15 = vector.load %arg6[%c0_12, %c0_13] : memref<128x128xf32, #tpu.memory_space<vmem>>, vector<128x128xf32>
    %cst_14 = arith.constant dense<0.000000e+00> : vector<8x128xf32>
    %16 = tpu.matmul %14, %15, %cst_14 {dimension_numbers = #tpu.dot_dimension_numbers<[1], [0], [0], [1], [0, 0, 1, 1], [], []>} : vector<8x128xf32>, vector<128x128xf32>, vector<8x128xf32> -> vector<8x128xf32>
    %c0_15 = arith.constant 0 : index
    %c0_16 = arith.constant 0 : index
    %17 = vector.load %arg7[%c0_15, %c0_16] : memref<1x128xf32, #tpu.memory_space<vmem>>, vector<1x128xf32>
    %18 = vector.broadcast %17 : vector<1x128xf32> to vector<8x128xf32>
    %19 = arith.addf %16, %18 : vector<8x128xf32>
    %20 = vector.extract_strided_slice %19 {offsets = [0, 0], sizes = [8, 4], strides = [1, 1]} : vector<8x128xf32> to vector<8x4xf32>
    %c0_17 = arith.constant 0 : index
    %c0_18 = arith.constant 0 : index
    %21 = vector.load %arg8[%c0_17, %c0_18] : memref<8x4xf32, #tpu.memory_space<vmem>>, vector<8x4xf32>
    tpu.vector_store %arg8[%c0_17, %c0_18], %20 {strides = array<i32>} : memref<8x4xf32, #tpu.memory_space<vmem>>, vector<8x4xf32>,
    return
  }
  func.func @transform_0(%arg0: i32) -> (i32, i32) {
    %c0_i32 = arith.constant 0 : i32
    %c0_i32_0 = arith.constant 0 : i32
    return %arg0, %c0_i32 : i32, i32
  }
  func.func @transform_1(%arg0: i32) -> (i32, i32) {
    %c0_i32 = arith.constant 0 : i32
    %c0_i32_0 = arith.constant 0 : i32
    %c0_i32_1 = arith.constant 0 : i32
    return %c0_i32, %c0_i32_0 : i32, i32
  }
  func.func @transform_2(%arg0: i32) -> (i32, i32) {
    %c0_i32 = arith.constant 0 : i32
    %c0_i32_0 = arith.constant 0 : i32
    %c0_i32_1 = arith.constant 0 : i32
    return %c0_i32, %c0_i32_0 : i32, i32
  }
  func.func @transform_3(%arg0: i32) -> (i32, i32) {
    %c0_i32 = arith.constant 0 : i32
    %c0_i32_0 = arith.constant 0 : i32
    %c0_i32_1 = arith.constant 0 : i32
    return %c0_i32, %c0_i32_0 : i32, i32
  }
  func.func @transform_4(%arg0: i32) -> (i32, i32) {
    %c0_i32 = arith.constant 0 : i32
    %c0_i32_0 = arith.constant 0 : i32
    %c0_i32_1 = arith.constant 0 : i32
    return %c0_i32, %c0_i32_0 : i32, i32
  }
  func.func @transform_5(%arg0: i32) -> (i32, i32) {
    %c0_i32 = arith.constant 0 : i32
    %c0_i32_0 = arith.constant 0 : i32
    %c0_i32_1 = arith.constant 0 : i32
    return %c0_i32, %c0_i32_0 : i32, i32
  }
  func.func @transform_6(%arg0: i32) -> (i32, i32) {
    %c0_i32 = arith.constant 0 : i32
    %c0_i32_0 = arith.constant 0 : i32
    %c0_i32_1 = arith.constant 0 : i32
    return %c0_i32, %c0_i32_0 : i32, i32
  }
  func.func @transform_7(%arg0: i32) -> (i32, i32) {
    %c0_i32 = arith.constant 0 : i32
    %c0_i32_0 = arith.constant 0 : i32
    return %arg0, %c0_i32 : i32, i32
  }
}

</mosaic_0001>

<llo_original>
// kernel: policy_nlp_forward.1
$region0: #{policy_nlp_forward.1}
  #allocation0 [shape = 'u32[]', space=smem, size = 0x4, offset = 0x4, fixed_abs, tag = 'smem constant byte address 0x4 - core index']
  #allocation1 [shape = 'u32[72,128]{1,0:T(1,128)}', space=vmem, size = 0x9000, scoped, tag = 'internal scratch']
  %s0 = inlined_call_operand.hbm [shape: f32[8,32], index: 0, kind: input, shape index: {}]
  %s1 = inlined_call_operand.hbm [shape: f32[32,128], index: 1, kind: input, shape index: {}]
  %s2 = inlined_call_operand.vmem [shape: f32[1,128], index: 2, kind: input, shape index: {}]
  %s3 = inlined_call_operand.hbm [shape: f32[128,128], index: 3, kind: input, shape index: {}]
  %s4 = inlined_call_operand.vmem [shape: f32[1,128], index: 4, kind: input, shape index: {}]
  %s5 = inlined_call_operand.hbm [shape: f32[128,128], index: 5, kind: input, shape index: {}]
  %s6 = inlined_call_operand.vmem [shape: f32[1,128], index: 6, kind: input, shape index: {}]
  %s7 = inlined_call_operand.vmem [shape: f32[8,4], index: 7, kind: output, shape index: {}]
  %s8 = sld [smem:[#allocation0]]
  $region54: #{policy_nlp_forward.1} parent=0
    _
  %s10 = ssub.s32 1, %s8
  %s11 = scalar_select 0, %s10, %s8
  $region1: #{policy_nlp_forward.1} parent=0
    #allocation2 [shape = 'u8[4096]{0}', space=vmem, size = 0x1000, scoped, tag = 'input window, operand 0, single buffered']
    #allocation3 [shape = 's32[1]{0}', space=sflag, size = 0x4, scoped, tag = 'scoped memory for policy_nlp_forward.1']
    #allocation4 [shape = 'u8[16384]{0}', space=vmem, size = 0x4000, scoped, tag = 'input window, operand 1, single buffered']
    #allocation5 [shape = 's32[1]{0}', space=sflag, size = 0x4, scoped, tag = 'scoped memory for policy_nlp_forward.1']
    #allocation6 [shape = 'u8[65536]{0}', space=vmem, size = 0x10000, scoped, tag = 'input window, operand 3, single buffered']
    #allocation7 [shape = 'u8[65536]{0}', space=vmem, size = 0x10000, scoped, tag = 'input window, operand 5, single buffered']
    #allocation8 [shape = 's32[1]{0}', space=sflag, size = 0x4, scoped, tag = 'scoped memory for policy_nlp_forward.1']
    %12 = vsyncpa [#allocation3], 0
    %13 = vsyncpa [#allocation5], 0
    %14 = vsyncpa [#allocation8], 0
    // Predicated region
    $region2: #{policy_nlp_forward.1} parent=1 // pred_check
      _
    $region3: #{policy_nlp_forward.1} parent=1 // pred_check_branch
      %16 = sbr.rel (0) target = $region5
    $region4: #{policy_nlp_forward.1} parent=1 // pred_region
      %18 = vsyncadd [#allocation3], 0
      %s20 = sshll.u32 %s0, 4
      %s21 = int_to_ptr.hbm [resolvable:$true] %s20
      %s22 = sshll.u32 [#allocation2], 4
      %s23 = int_to_ptr.vmem [resolvable:$true] %s22
      %25 = dma.hbm_to_vmem [thread:$0]  %s21, 128, %s23, [#allocation3]
    $region5: #{policy_nlp_forward.1} parent=1 // pred_fallthru
      _
    // Predicated region
    $region6: #{policy_nlp_forward.1} parent=1 // pred_check
      _
    $region7: #{policy_nlp_forward.1} parent=1 // pred_check_branch
      %27 = sbr.rel (0) target = $region9
    $region8: #{policy_nlp_forward.1} parent=1 // pred_region
      %29 = vsyncadd [#allocation5], 0
      %s30 = sshll.u32 %s1, 4
      %s31 = int_to_ptr.hbm [resolvable:$true] %s30
      %s32 = sshll.u32 [#allocation4], 4
      %s33 = int_to_ptr.vmem [resolvable:$true] %s32
      %38 = dma.hbm_to_vmem [thread:$0]  %s31, 512, %s33, [#allocation5], 128, 128, 8
    $region9: #{policy_nlp_forward.1} parent=1 // pred_fallthru
      _
    // Predicated region
    $region10: #{policy_nlp_forward.1} parent=1 // pred_check
      _
    $region11: #{policy_nlp_forward.1} parent=1 // pred_check_branch
      %40 = sbr.rel (0) target = $region13
    $region12: #{policy_nlp_forward.1} parent=1 // pred_region
      _
    $region13: #{policy_nlp_forward.1} parent=1 // pred_fallthru
      _
    // Predicated region
    $region14: #{policy_nlp_forward.1} parent=1 // pred_check
      _
    $region15: #{policy_nlp_forward.1} parent=1 // pred_check_branch
      %42 = sbr.rel (0) target = $region17
    $region16: #{policy_nlp_forward.1} parent=1 // pred_region
      %44 = vsyncadd [#allocation5], 0
      %s45 = sshll.u32 %s3, 4
      %s46 = int_to_ptr.hbm [resolvable:$true] %s45
      %s47 = sshll.u32 [#allocation6], 4
      %s48 = int_to_ptr.vmem [resolvable:$true] %s47
      %53 = dma.hbm_to_vmem [thread:$0]  %s46, 2048, %s48, [#allocation5], 128, 128, 8
    $region17: #{policy_nlp_forward.1} parent=1 // pred_fallthru
      _
    // Predicated region
    $region18: #{policy_nlp_forward.1} parent=1 // pred_check
      _
    $region19: #{policy_nlp_forward.1} parent=1 // pred_check_branch
      %55 = sbr.rel (0) target = $region21
    $region20: #{policy_nlp_forward.1} parent=1 // pred_region
      _
    $region21: #{policy_nlp_forward.1} parent=1 // pred_fallthru
      _
    // Predicated region
    $region22: #{policy_nlp_forward.1} parent=1 // pred_check
      _
    $region23: #{policy_nlp_forward.1} parent=1 // pred_check_branch
      %57 = sbr.rel (0) target = $region25
    $region24: #{policy_nlp_forward.1} parent=1 // pred_region
      %59 = vsyncadd [#allocation8], 0
      %s60 = sshll.u32 %s5, 4
      %s61 = int_to_ptr.hbm [resolvable:$true] %s60
      %s62 = sshll.u32 [#allocation7], 4
      %s63 = int_to_ptr.vmem [resolvable:$true] %s62
      %68 = dma.hbm_to_vmem [thread:$0]  %s61, 2048, %s63, [#allocation8], 128, 128, 8
    $region25: #{policy_nlp_forward.1} parent=1 // pred_fallthru
      _
    // Predicated region
    $region26: #{policy_nlp_forward.1} parent=1 // pred_check
      _
    $region27: #{policy_nlp_forward.1} parent=1 // pred_check_branch
      %70 = sbr.rel (0) target = $region29
    $region28: #{policy_nlp_forward.1} parent=1 // pred_region
      _
    $region29: #{policy_nlp_forward.1} parent=1 // pred_fallthru
      _
    // Predicated region
    $region30: #{policy_nlp_forward.1} parent=1 // pred_check
      _
    $region31: #{policy_nlp_forward.1} parent=1 // pred_check_branch
      %72 = sbr.rel (0) target = $region33
    $region32: #{policy_nlp_forward.1} parent=1 // pred_region
      %74 = dma.done [#allocation3], 128
    $region33: #{policy_nlp_forward.1} parent=1 // pred_fallthru
      _
    // Predicated region
    $region34: #{policy_nlp_forward.1} parent=1 // pred_check
      _
    $region35: #{policy_nlp_forward.1} parent=1 // pred_check_branch
      %76 = sbr.rel (0) target = $region37
    $region36: #{policy_nlp_forward.1} parent=1 // pred_region
      %78 = dma.done [#allocation5], 512
    $region37: #{policy_nlp_forward.1} parent=1 // pred_fallthru
      _
    // Predicated region
    $region38: #{policy_nlp_forward.1} parent=1 // pred_check
      _
    $region39: #{policy_nlp_forward.1} parent=1 // pred_check_branch
      %80 = sbr.rel (0) target = $region41
    $region40: #{policy_nlp_forward.1} parent=1 // pred_region
      %82 = dma.done [#allocation5], 2048
    $region41: #{policy_nlp_forward.1} parent=1 // pred_fallthru
      _
    // Predicated region
    $region42: #{policy_nlp_forward.1} parent=1 // pred_check
      _
    $region43: #{policy_nlp_forward.1} parent=1 // pred_check_branch
      %84 = sbr.rel (0) target = $region45
    $region44: #{policy_nlp_forward.1} parent=1 // pred_region
      %86 = dma.done [#allocation8], 2048
    $region45: #{policy_nlp_forward.1} parent=1 // pred_fallthru
      _
    %v87 = vld [vmem:[#allocation2] sm:$0xff]
    %v88 = vld [vmem:[#allocation4] sm:$0xff]
    %v89 = vld [vmem:[#allocation4 + $0x8] sm:$0xff]
    %v90 = vld [vmem:[#allocation4 + $0x10] sm:$0xff]
    %v91 = vld [vmem:[#allocation4 + $0x18] sm:$0xff]
    %v92 = vld [vmem:[%s2] sm:$0x1]
    %v94 = vperm.slane %v92, 0
    %vm96 = vcmask 261120
    %v98 = vsel %vm96, %v87, 0
    %100 = vmatpush.msra.mxu0 0.0
    %101 = vmatpush.msra.mxu0 0.0
    %102 = vmatpush.msra.mxu0 0.0
    %103 = vmatpush.msra.mxu0 0.0
    %104 = vmatpush.msra.mxu0 0.0
    %105 = vmatpush.msra.mxu0 0.0
    %106 = vmatpush.msra.mxu0 0.0
    %107 = vmatpush.msra.mxu0 0.0
    %108 = vmatpush.msra.mxu0 0.0
    %109 = vmatpush.msra.mxu0 0.0
    %110 = vmatpush.msra.mxu0 0.0
    %111 = vmatpush.msra.mxu0 0.0
    %112 = vmatpush.msra.mxu0 %v91
    %113 = vmatpush.msra.mxu0 %v90
    %114 = vmatpush.msra.mxu0 %v89
    %115 = vmatpush.msra.mxu0 %v88
    %116 = vmatmul.f32.gmra.mxu0 %v98
    %v117 = vpop.f32.mrf.mxu0
    %v118 = vadd.f32 %v94, %v117
    %119 = vdwg.mxu0
    %v120 = vmax.f32 %v118, 0.0
    %v121 = vld [vmem:[#allocation6] sm:$0xff]
    %v122 = vld [vmem:[#allocation6 + $0x8] sm:$0xff]
    %v123 = vld [vmem:[#allocation6 + $0x10] sm:$0xff]
    %v124 = vld [vmem:[#allocation6 + $0x18] sm:$0xff]
    %v125 = vld [vmem:[#allocation6 + $0x20] sm:$0xff]
    %v126 = vld [vmem:[#allocation6 + $0x28] sm:$0xff]
    %v127 = vld [vmem:[#allocation6 + $0x30] sm:$0xff]
    %v128 = vld [vmem:[#allocation6 + $0x38] sm:$0xff]
    %v129 = vld [vmem:[#allocation6 + $0x40] sm:$0xff]
    %v130 = vld [vmem:[#allocation6 + $0x48] sm:$0xff]
    %v131 = vld [vmem:[#allocation6 + $0x50] sm:$0xff]
    %v132 = vld [vmem:[#allocation6 + $0x58] sm:$0xff]
    %v133 = vld [vmem:[#allocation6 + $0x60] sm:$0xff]
    %v134 = vld [vmem:[#allocation6 + $0x68] sm:$0xff]
    %v135 = vld [vmem:[#allocation6 + $0x70] sm:$0xff]
    %v136 = vld [vmem:[#allocation6 + $0x78] sm:$0xff]
    %v137 = vld [vmem:[%s4] sm:$0x1]
    %v139 = vperm.slane %v137, 0
    %141 = vmatpush.msra.mxu0 %v136
    %142 = vmatpush.msra.mxu0 %v135
    %143 = vmatpush.msra.mxu0 %v134
    %144 = vmatpush.msra.mxu0 %v133
    %145 = vmatpush.msra.mxu0 %v132
    %146 = vmatpush.msra.mxu0 %v131
    %147 = vmatpush.msra.mxu0 %v130
    %148 = vmatpush.msra.mxu0 %v129
    %149 = vmatpush.msra.mxu0 %v128
    %150 = vmatpush.msra.mxu0 %v127
    %151 = vmatpush.msra.mxu0 %v126
    %152 = vmatpush.msra.mxu0 %v125
    %153 = vmatpush.msra.mxu0 %v124
    %154 = vmatpush.msra.mxu0 %v123
    %155 = vmatpush.msra.mxu0 %v122
    %156 = vmatpush.msra.mxu0 %v121
    %157 = vmatmul.f32.gmra.mxu0 %v120
    %v158 = vpop.f32.mrf.mxu0
    %v159 = vadd.f32 %v139, %v158
    %160 = vdwg.mxu0
    %v161 = vmax.f32 %v159, 0.0
    %v162 = vld [vmem:[#allocation7] sm:$0xff]
    %v163 = vld [vmem:[#allocation7 + $0x8] sm:$0xff]
    %v164 = vld [vmem:[#allocation7 + $0x10] sm:$0xff]
    %v165 = vld [vmem:[#allocation7 + $0x18] sm:$0xff]
    %v166 = vld [vmem:[#allocation7 + $0x20] sm:$0xff]
    %v167 = vld [vmem:[#allocation7 + $0x28] sm:$0xff]
    %v168 = vld [vmem:[#allocation7 + $0x30] sm:$0xff]
    %v169 = vld [vmem:[#allocation7 + $0x38] sm:$0xff]
    %v170 = vld [vmem:[#allocation7 + $0x40] sm:$0xff]
    %v171 = vld [vmem:[#allocation7 + $0x48] sm:$0xff]
    %v172 = vld [vmem:[#allocation7 + $0x50] sm:$0xff]
    %v173 = vld [vmem:[#allocation7 + $0x58] sm:$0xff]
    %v174 = vld [vmem:[#allocation7 + $0x60] sm:$0xff]
    %v175 = vld [vmem:[#allocation7 + $0x68] sm:$0xff]
    %v176 = vld [vmem:[#allocation7 + $0x70] sm:$0xff]
    %v177 = vld [vmem:[#allocation7 + $0x78] sm:$0xff]
    %v178 = vld [vmem:[%s6] sm:$0x1]
    %v180 = vperm.slane %v178, 0
    %182 = vmatpush.msra.mxu0 %v177
    %183 = vmatpush.msra.mxu0 %v176
    %184 = vmatpush.msra.mxu0 %v175
    %185 = vmatpush.msra.mxu0 %v174
    %186 = vmatpush.msra.mxu0 %v173
    %187 = vmatpush.msra.mxu0 %v172
    %188 = vmatpush.msra.mxu0 %v171
    %189 = vmatpush.msra.mxu0 %v170
    %190 = vmatpush.msra.mxu0 %v169
    %191 = vmatpush.msra.mxu0 %v168
    %192 = vmatpush.msra.mxu0 %v167
    %193 = vmatpush.msra.mxu0 %v166
    %194 = vmatpush.msra.mxu0 %v165
    %195 = vmatpush.msra.mxu0 %v164
    %196 = vmatpush.msra.mxu0 %v163
    %197 = vmatpush.msra.mxu0 %v162
    %198 = vmatmul.f32.gmra.mxu0 %v161
    %v199 = vpop.f32.mrf.mxu0
    %v200 = vadd.f32 %v180, %v199
    %201 = vdwg.mxu0
    %vm202 = vcmask 31744
    %203 = vst.msk [vmem:[%s7] sm:$0xff] %vm202, %v200
    // Predicated region
    $region46: #{policy_nlp_forward.1} parent=1 // pred_check
      _
    $region47: #{policy_nlp_forward.1} parent=1 // pred_check_branch
      %205 = sbr.rel (0) target = $region49
    $region48: #{policy_nlp_forward.1} parent=1 // pred_region
      _
    $region49: #{policy_nlp_forward.1} parent=1 // pred_fallthru
      _
    // Predicated region
    $region50: #{policy_nlp_forward.1} parent=1 // pred_check
      _
    $region51: #{policy_nlp_forward.1} parent=1 // pred_check_branch
      %207 = sbr.rel (0) target = $region53
    $region52: #{policy_nlp_forward.1} parent=1 // pred_region
      _
    $region53: #{policy_nlp_forward.1} parent=1 // pred_fallthru
      _
    %208 = vsyncpa [#allocation3], 1
    %209 = vsyncpa [#allocation5], 1
    %210 = vsyncpa [#allocation8], 1

</llo_original>
